<compile_context>
chip_gen: v5e
topology: v5e:2x2
jax: 0.10.0
libtpu: 0.0.40
codegen_flags: <defaults>
</compile_context>

<pallas_src>
import jax
import jax.numpy as jnp
from jax.experimental import pallas as pl
from jax.experimental.pallas import tpu as pltpu


def _shiftlist(pad, hidden_dim):
    """Identical to CycleFC.shiftlist (pure Python, static)."""
    x_shift = list(range(-pad, pad + 1))
    x_r_shift = list(range(pad - 1, -pad, -1))
    x_list = x_shift + x_r_shift
    n = hidden_dim // len(x_list) + 1
    x_list = x_list * n
    return x_list[:hidden_dim]


def _pick_channel_tile(C, hw, itemsize, max_block_bytes):
    """Largest channel tile that divides C, respects the sublane granularity
    for the dtype, and keeps one (Tc, H*W) block under max_block_bytes."""
    sublane = {4: 8, 2: 16, 1: 32}.get(itemsize, 8)
    if C % sublane != 0:
        return C  # whole-C block: block dim == full dim satisfies the tiling rule
    tc = sublane
    t = sublane
    while t <= C:
        if C % t == 0 and t * hw * itemsize <= max_block_bytes:
            tc = t
        t += sublane
    return tc


def cycle_fc_pallas(x, *, shift_size, dim, max_block_bytes=2 * 1024 * 1024):
    """Pallas TPU implementation of CycleFC(shift_size, dim).forward(x)."""
    assert dim in (2, 3), "CycleFC roll axis must be H (2) or W (3) in NCHW"
    B, C, H, W = x.shape
    HW = H * W
    pad = shift_size // 2
    assert pad >= 1, "shift_size must be >= 2 (pad >= 1) for a well-defined crop"

    shifts = _shiftlist(pad, C)                       # static per-channel shifts
    present = sorted(set(shifts))                     # <= 2*pad+1 distinct values
    shift_arr = jnp.asarray(shifts, dtype=jnp.int32).reshape(C, 1)

    if dim == 3:
        # coordinate along the shifted axis for every flat position q = h*W + w
        pos = jnp.tile(jnp.arange(W, dtype=jnp.int32), H).reshape(1, HW)   # w coord
        extent = W
        flat_mult = 1           # shift by s along W == flat shift by s
    else:
        pos = jnp.repeat(jnp.arange(H, dtype=jnp.int32), W).reshape(1, HW)  # h coord
        extent = H
        flat_mult = W           # shift by s along H == flat shift by s*W

    itemsize = x.dtype.itemsize
    Tc = _pick_channel_tile(C, HW, itemsize, max_block_bytes)
    n_cblk = C // Tc

    x3 = x.reshape(B, C, HW)    # lane-dense layout: last dim = H*W

    def kernel(x_ref, shift_ref, pos_ref, o_ref):
        xt = x_ref[0]                  # (Tc, HW)   activation slab
        sc = shift_ref[...]            # (Tc, 1)    per-channel shift values
        p = pos_ref[...]               # (1, HW)    coordinate along shifted axis
        out = jnp.zeros_like(xt)
        # One whole-slab roll + select per distinct shift value (<= 2*pad+1).
        for s in present:              # static Python loop
            chan = sc == s             # (Tc, 1) channels carrying this shift
            if s == 0:
                out = jnp.where(chan, xt, out)
            else:
                s_flat = (s * flat_mult) % HW
                rolled = pltpu.roll(xt, s_flat, 1)     # rolled[q] = xt[(q - s_flat) % HW]
                # zero-fill validity: coordinate - s must stay inside [0, extent)
                valid = jnp.logical_and(p >= s, p < extent + s)   # (1, HW)
                mask = jnp.logical_and(chan, valid)               # (Tc, HW)
                out = jnp.where(mask, rolled, out)
        o_ref[0] = out

    y3 = pl.pallas_call(
        kernel,
        out_shape=jax.ShapeDtypeStruct((B, C, HW), x.dtype),
        grid=(B, n_cblk),
        in_specs=[
            pl.BlockSpec((1, Tc, HW), lambda b, cb: (b, cb, 0)),   # activations
            pl.BlockSpec((Tc, 1), lambda b, cb: (cb, 0)),          # per-channel shifts
            pl.BlockSpec((1, HW), lambda b, cb: (0, 0)),           # coordinate row
        ],
        out_specs=pl.BlockSpec((1, Tc, HW), lambda b, cb: (b, cb, 0)),
        input_output_aliases={0: 0},   # output may reuse x's HBM buffer if donated
        compiler_params=pltpu.CompilerParams(
            dimension_semantics=("parallel", "parallel")),
    )(x3, shift_arr, pos)

    return y3.reshape(B, C, H, W)


def cycle_fc_ref(x, shift_size, dim):
    """Pure-JAX reference that mirrors the PyTorch forward literally."""
    pad = shift_size // 2
    B, C, H, W = x.shape
    xp = jnp.pad(x, ((0, 0), (0, 0), (pad, pad), (pad, pad)))
    shifts = _shiftlist(pad, C)
    chans = [jnp.roll(xp[:, c:c + 1], shifts[c], axis=dim) for c in range(C)]
    xc = jnp.concatenate(chans, axis=1)
    return xc[:, :, pad:-pad, pad:-pad]


if __name__ == "__main__":
    key0 = jax.random.PRNGKey(0)
    k1, k2 = jax.random.split(key0)

    # --- Config 1: small shapes (module's natural test size), pad = 1 ---
    B, C, H, W = 2, 4, 16, 16
    x = jax.random.normal(k1, (B, C, H, W), dtype=jnp.float32)
    ref_w = cycle_fc_ref(x, 3, 3)   # compute references before any kernel call
    ref_h = cycle_fc_ref(x, 3, 2)

    y = cycle_fc_pallas(x, shift_size=3, dim=3)
    jax.block_until_ready(y)
    assert y.shape == (B, C, H, W)
    assert jnp.array_equal(y, ref_w), "dim=3 (W shift) mismatch"

    y2 = cycle_fc_pallas(x, shift_size=3, dim=2)
    jax.block_until_ready(y2)
    assert jnp.array_equal(y2, ref_h), "dim=2 (H shift) mismatch"

    # --- Config 2: more channels + larger shift_size; force channel tiling
    #     (multi-block grid) via a small per-block byte budget ---
    B2, C2, H2, W2 = 2, 64, 16, 16
    x2 = jax.random.normal(k2, (B2, C2, H2, W2), dtype=jnp.float32)
    ref2_w = cycle_fc_ref(x2, 5, 3)
    ref2_h = cycle_fc_ref(x2, 5, 2)

    y3 = cycle_fc_pallas(x2, shift_size=5, dim=3, max_block_bytes=32 * 1024)
    jax.block_until_ready(y3)
    assert jnp.array_equal(y3, ref2_w), "tiled dim=3 mismatch"

    y4 = cycle_fc_pallas(x2, shift_size=5, dim=2, max_block_bytes=32 * 1024)
    jax.block_until_ready(y4)
    assert jnp.array_equal(y4, ref2_h), "tiled dim=2 mismatch"

    print("KERNEL_OK")
</pallas_src>

<mosaic_0001>
module attributes {stable_mosaic.version = 11 : i64} {
  func.func @kernel(%arg0: i32, %arg1: i32, %arg2: memref<1x4x256xf32, #tpu.memory_space<vmem>>, %arg3: memref<4x1xi32, #tpu.memory_space<vmem>>, %arg4: memref<1x256xi32, #tpu.memory_space<vmem>>, %arg5: memref<1x4x256xf32, #tpu.memory_space<vmem>>) attributes {dimension_semantics = [#tpu.dimension_semantics<parallel>, #tpu.dimension_semantics<parallel>], iteration_bounds = array<i64: 2, 1>, scalar_prefetch = 0 : i64, scratch_operands = 0 : i64, tpu.core_type = #tpu.core_type<tc>, window_params = [{transform_indices = @transform_0, window_bounds = array<i64: 1, 4, 256>}, {transform_indices = @transform_1, window_bounds = array<i64: 4, 1>}, {pipeline_mode = #tpu.pipeline_mode<synchronous>, transform_indices = @transform_2, window_bounds = array<i64: 1, 256>}, {transform_indices = @transform_3, window_bounds = array<i64: 1, 4, 256>}]} {
    %c0 = arith.constant 0 : index
    %c0_0 = arith.constant 0 : index
    %c0_1 = arith.constant 0 : index
    %0 = vector.load %arg2[%c0, %c0_0, %c0_1] : memref<1x4x256xf32, #tpu.memory_space<vmem>>, vector<1x4x256xf32>
    %1 = vector.shape_cast %0 : vector<1x4x256xf32> to vector<4x256xf32>
    %c0_2 = arith.constant 0 : index
    %c0_3 = arith.constant 0 : index
    %2 = vector.load %arg3[%c0_2, %c0_3] : memref<4x1xi32, #tpu.memory_space<vmem>>, vector<4x1xi32>
    %c0_4 = arith.constant 0 : index
    %c0_5 = arith.constant 0 : index
    %3 = vector.load %arg4[%c0_4, %c0_5] : memref<1x256xi32, #tpu.memory_space<vmem>>, vector<1x256xi32>
    %cst = arith.constant 0.000000e+00 : f32
    %4 = vector.broadcast %cst : f32 to vector<4x256xf32>
    %c-1_i32 = arith.constant -1 : i32
    %5 = vector.broadcast %c-1_i32 : i32 to vector<4x1xi32>
    %6 = arith.cmpi eq, %2, %5 : vector<4x1xi32>
    %c255_i32 = arith.constant 255 : i32
    %7 = tpu.dynamic_rotate %1 by %c255_i32 dim 1 : vector<4x256xf32>, i32 -> vector<4x256xf32>
    %c-1_i32_6 = arith.constant -1 : i32
    %8 = vector.broadcast %c-1_i32_6 : i32 to vector<1x256xi32>
    %9 = arith.cmpi sge, %3, %8 : vector<1x256xi32>
    %c15_i32 = arith.constant 15 : i32
    %10 = vector.broadcast %c15_i32 : i32 to vector<1x256xi32>
    %11 = arith.cmpi slt, %3, %10 : vector<1x256xi32>
    %12 = arith.andi %9, %11 : vector<1x256xi1>
    %13 = vector.broadcast %6 : vector<4x1xi1> to vector<4x256xi1>
    %14 = vector.broadcast %12 : vector<1x256xi1> to vector<4x256xi1>
    %15 = arith.andi %13, %14 : vector<4x256xi1>
    %16 = arith.select %15, %7, %4 : vector<4x256xi1>, vector<4x256xf32>
    %c0_i32 = arith.constant 0 : i32
    %17 = vector.broadcast %c0_i32 : i32 to vector<4x1xi32>
    %18 = arith.cmpi eq, %2, %17 : vector<4x1xi32>
    %19 = vector.shape_cast %18 : vector<4x1xi1> to vector<4x1xi1>
    %20 = vector.broadcast %19 : vector<4x1xi1> to vector<4x256xi1>
    %21 = arith.select %20, %1, %16 : vector<4x256xi1>, vector<4x256xf32>
    %c1_i32 = arith.constant 1 : i32
    %22 = vector.broadcast %c1_i32 : i32 to vector<4x1xi32>
    %23 = arith.cmpi eq, %2, %22 : vector<4x1xi32>
    %c1_i32_7 = arith.constant 1 : i32
    %24 = tpu.dynamic_rotate %1 by %c1_i32_7 dim 1 : vector<4x256xf32>, i32 -> vector<4x256xf32>
    %c1_i32_8 = arith.constant 1 : i32
    %25 = vector.broadcast %c1_i32_8 : i32 to vector<1x256xi32>
    %26 = arith.cmpi sge, %3, %25 : vector<1x256xi32>
    %c17_i32 = arith.constant 17 : i32
    %27 = vector.broadcast %c17_i32 : i32 to vector<1x256xi32>
    %28 = arith.cmpi slt, %3, %27 : vector<1x256xi32>
    %29 = arith.andi %26, %28 : vector<1x256xi1>
    %30 = vector.broadcast %23 : vector<4x1xi1> to vector<4x256xi1>
    %31 = vector.broadcast %29 : vector<1x256xi1> to vector<4x256xi1>
    %32 = arith.andi %30, %31 : vector<4x256xi1>
    %33 = arith.select %32, %24, %21 : vector<4x256xi1>, vector<4x256xf32>
    %c0_9 = arith.constant 0 : index
    %c0_10 = arith.constant 0 : index
    %c0_11 = arith.constant 0 : index
    %34 = vector.load %arg5[%c0_9, %c0_10, %c0_11] : memref<1x4x256xf32, #tpu.memory_space<vmem>>, vector<1x4x256xf32>
    %35 = vector.shape_cast %34 : vector<1x4x256xf32> to vector<4x256xf32>
    %36 = vector.shape_cast %33 : vector<4x256xf32> to vector<1x4x256xf32>
    tpu.vector_store %arg5[%c0_9, %c0_10, %c0_11], %36 {strides = array<i32>} : memref<1x4x256xf32, #tpu.memory_space<vmem>>, vector<1x4x256xf32>,
    return
  }
  func.func @transform_0(%arg0: i32, %arg1: i32) -> (i32, i32, i32) {
    %c0_i32 = arith.constant 0 : i32
    %c0_i32_0 = arith.constant 0 : i32
    return %arg0, %arg1, %c0_i32 : i32, i32, i32
  }
  func.func @transform_1(%arg0: i32, %arg1: i32) -> (i32, i32) {
    %c0_i32 = arith.constant 0 : i32
    %c0_i32_0 = arith.constant 0 : i32
    return %arg1, %c0_i32 : i32, i32
  }
  func.func @transform_2(%arg0: i32, %arg1: i32) -> (i32, i32) {
    %c0_i32 = arith.constant 0 : i32
    %c0_i32_0 = arith.constant 0 : i32
    %c0_i32_1 = arith.constant 0 : i32
    return %c0_i32, %c0_i32_0 : i32, i32
  }
  func.func @transform_3(%arg0: i32, %arg1: i32) -> (i32, i32, i32) {
    %c0_i32 = arith.constant 0 : i32
    %c0_i32_0 = arith.constant 0 : i32
    return %arg0, %arg1, %c0_i32 : i32, i32, i32
  }
}

</mosaic_0001>

<llo_original>
// kernel: tpu_custom_call.1
$region0: #{tpu_custom_call.1}
  #allocation0 [shape = 'u32[]', space=smem, size = 0x4, offset = 0x4, fixed_abs, tag = 'smem constant byte address 0x4 - core index']
  #allocation1 [shape = 'u32[72,128]{1,0:T(1,128)}', space=vmem, size = 0x9000, scoped, tag = 'internal scratch']
  %s0 = inlined_call_operand.hbm [shape: f32[2,4,256], index: 0, kind: input, shape index: {}, may-alias: {0,3}]
  %s1 = inlined_call_operand.vmem [shape: s32[4,1], index: 1, kind: input, shape index: {}]
  %s2 = inlined_call_operand.vmem [shape: s32[1,256], index: 2, kind: input, shape index: {}]
  %s3 = inlined_call_operand.hbm [shape: f32[2,4,256], index: 3, kind: output, shape index: {}, may-alias: {0,3}]
  %s4 = sld [smem:[#allocation0]]
  $region49: #{tpu_custom_call.1} parent=0
    _
  %s6 = ssub.s32 1, %s4
  %s7 = scalar_select 0, %s6, %s4
  $region1: #{tpu_custom_call.1} parent=0
    #allocation2 [shape = 'u8[8192]{0}', space=vmem, size = 0x2000, scoped, tag = 'input window, operand 0']
    #allocation3 [shape = 's32[2]{0}', space=sflag, size = 0x8, scoped, tag = 'scoped memory for tpu_custom_call.1']
    #allocation4 [shape = 's32[2]{0}', space=sflag, size = 0x8, scoped, tag = 'scoped memory for tpu_custom_call.1']
    #allocation5 [shape = 'u8[8192]{0}', space=vmem, size = 0x2000, scoped, tag = 'output window, operand 0']
    %8 = vsyncpa [#allocation3], 0
    %s9 = scalar_lea.sflag [#allocation3], 1
    %10 = vsyncpa %s9, 0
    %11 = vsyncpa [#allocation4], 0
    %s12 = scalar_lea.sflag [#allocation4], 1
    %13 = vsyncpa %s12, 0
    loop: start=0, step=1, limit=4
    $region2: #{tpu_custom_call.1} parent=1 // loop_pre_header
      _
    $region3: #{tpu_custom_call.1} parent=1 // loop_header
      %s15 = sphi 0, %s19
      %p16 = scmp.ge.s32.totalorder %s15, 4
      %s22 = sphi 0, %s34
      %s23 = sphi 0, %s30
      %s24 = sphi 0, %s22
      %s25 = sphi 0, %s23
      %s26 = sphi 0, %s24
      %s27 = sphi 0, %s25
      %s39 = sphi 0, %s41
      %s42 = sphi 0, %s39
      %s43 = sphi 0, %s42
      %s59 = sphi 0, %s43
      %s65 = sphi 0, %s67
      %s68 = sphi 0, %s65
      %s69 = sphi 0, %s68
      %s85 = sphi 0, %s69
      %s89 = sphi 0, %s89
      %s91 = sphi 0, %s89
      %s92 = sphi 0, %s91
      %s106 = sphi 0, %s92
      %s114 = sphi 0, %s116
      %s117 = sphi 0, %s114
      %s118 = sphi 0, %s117
      %s134 = sphi 0, %s118
    $region4: #{tpu_custom_call.1} parent=1 // loop_header_branch
      %18 = sbr.rel (%p16) target = $region8
    $region5: #{tpu_custom_call.1} parent=1 // loop_body
      %s20 = ssub.s32 %s15, 1
      %s21 = ssub.s32 %s15, 2
      %s28 = sadd.s32 1, %s23
      %p29 = scmp.ge.s32.totalorder %s28, 1
      %s30 = scalar_select %p29, 0, %s28
      %s31 = sadd.s32 1, %s22
      %s32 = scalar_select %p29, %s31, %s22
      %p33 = scmp.ge.s32.totalorder %s32, 2
      %s34 = scalar_select %p33, 0, %s32
      %s35 = ssub.s32 %s22, %s34
      %s36 = ssub.s32 %s23, %s30
      %s37 = sor.u32 %s35, %s36
      %p38 = scmp.eq.s32.totalorder %s37, 0
      %s40 = sadd.s32 %s39, 1
      %s41 = scalar_select %p38, %s39, %s40
      %p44 = pneg %p38
      %p45 = scmp.eq.s32.totalorder %s15, 1
      %p46 = por %p44, %p45
      %p47 = scmp.ne.s32.totalorder %s39, %s42
      %p48 = scmp.eq.s32.totalorder %s15, 0
      %p49 = por %p47, %p48
      %p50 = scmp.ne.s32.totalorder %s39, %s42
      %p51 = scmp.eq.s32.totalorder %s20, 1
      %p52 = por %p50, %p51
      %p53 = scmp.ne.s32.totalorder %s42, %s43
      %p54 = scmp.eq.s32.totalorder %s20, 0
      %p55 = por %p53, %p54
      %p56 = scmp.ne.s32.totalorder %s42, %s43
      %p57 = scmp.eq.s32.totalorder %s21, 1
      %p58 = por %p56, %p57
      %p60 = scmp.ne.s32.totalorder %s43, %s59
      %p61 = scmp.eq.s32.totalorder %s21, 0
      %p62 = por %p60, %p61
      %s63 = ssub.s32 %s23, %s30
      %p64 = scmp.eq.s32.totalorder %s63, 0
      %s66 = sadd.s32 %s65, 1
      %s67 = scalar_select %p64, %s65, %s66
      %p70 = pneg %p64
      %p71 = scmp.eq.s32.totalorder %s15, 1
      %p72 = por %p70, %p71
      %p73 = scmp.ne.s32.totalorder %s65, %s68
      %p74 = scmp.eq.s32.totalorder %s15, 0
      %p75 = por %p73, %p74
      %p76 = scmp.ne.s32.totalorder %s65, %s68
      %p77 = scmp.eq.s32.totalorder %s20, 1
      %p78 = por %p76, %p77
      %p79 = scmp.ne.s32.totalorder %s68, %s69
      %p80 = scmp.eq.s32.totalorder %s20, 0
      %p81 = por %p79, %p80
      %p82 = scmp.ne.s32.totalorder %s68, %s69
      %p83 = scmp.eq.s32.totalorder %s21, 1
      %p84 = por %p82, %p83
      %p86 = scmp.ne.s32.totalorder %s69, %s85
      %p87 = scmp.eq.s32.totalorder %s21, 0
      %p88 = por %p86, %p87
      %s90 = sadd.s32 %s89, 1
      %p93 = scmp.eq.s32.totalorder %s15, 1
      %p94 = scmp.ne.s32.totalorder %s89, %s91
      %p95 = scmp.eq.s32.totalorder %s15, 0
      %p96 = por %p94, %p95
      %p97 = scmp.ne.s32.totalorder %s89, %s91
      %p98 = scmp.eq.s32.totalorder %s20, 1
      %p99 = por %p97, %p98
      %p100 = scmp.ne.s32.totalorder %s91, %s92
      %p101 = scmp.eq.s32.totalorder %s20, 0
      %p102 = por %p100, %p101
      %p103 = scmp.ne.s32.totalorder %s91, %s92
      %p104 = scmp.eq.s32.totalorder %s21, 1
      %p105 = por %p103, %p104
      %p107 = scmp.ne.s32.totalorder %s92, %s106
      %p108 = scmp.eq.s32.totalorder %s21, 0
      %p109 = por %p107, %p108
      %s110 = ssub.s32 %s22, %s34
      %s111 = ssub.s32 %s23, %s30
      %s112 = sor.u32 %s110, %s111
      %p113 = scmp.eq.s32.totalorder %s112, 0
      %s115 = sadd.s32 %s114, 1
      %s116 = scalar_select %p113, %s114, %s115
      %p119 = pneg %p113
      %p120 = scmp.eq.s32.totalorder %s15, 1
      %p121 = por %p119, %p120
      %p122 = scmp.ne.s32.totalorder %s114, %s117
      %p123 = scmp.eq.s32.totalorder %s15, 0
      %p124 = por %p122, %p123
      %p125 = scmp.ne.s32.totalorder %s114, %s117
      %p126 = scmp.eq.s32.totalorder %s20, 1
      %p127 = por %p125, %p126
      %p128 = scmp.ne.s32.totalorder %s117, %s118
      %p129 = scmp.eq.s32.totalorder %s20, 0
      %p130 = por %p128, %p129
      %p131 = scmp.ne.s32.totalorder %s117, %s118
      %p132 = scmp.eq.s32.totalorder %s21, 1
      %p133 = por %p131, %p132
      %p135 = scmp.ne.s32.totalorder %s118, %s134
      %p136 = scmp.eq.s32.totalorder %s21, 0
      %p137 = por %p135, %p136
      %p138 = scmp.le.s32.totalorder 1, %s15
      %p139 = scmp.lt.s32.totalorder %s15, 3
      %p140 = pnand %p138, %p139
      %p141 = pneg %p140
      // Predicated region
      $region9: #{tpu_custom_call.1} parent=5 // pred_check
        _
      $region10: #{tpu_custom_call.1} parent=5 // pred_check_branch
        %143 = sbr.rel (%p140) target = $region12
      $region11: #{tpu_custom_call.1} parent=5 // pred_region
        %s144 = ssub.s32 %s15, 1
        // Predicated region
        $region13: #{tpu_custom_call.1} parent=11 // pred_check
          %p145 = pneg %p81
        $region14: #{tpu_custom_call.1} parent=11 // pred_check_branch
          %147 = sbr.rel (%p145) target = $region16
        $region15: #{tpu_custom_call.1} parent=11 // pred_region
          %p148 = scmp.lt.s32.totalorder %s25, 0
          %s149 = scalar_select %p148, %s25, 0
          %s150 = smul.addr %s149, 4
          %s151 = scalar_lea.vmem %s1, %s150
        $region16: #{tpu_custom_call.1} parent=11 // pred_fallthru
          _
        // Predicated region
        $region17: #{tpu_custom_call.1} parent=11 // pred_check
          %p152 = pneg %p102
        $region18: #{tpu_custom_call.1} parent=11 // pred_check_branch
          %154 = sbr.rel (%p152) target = $region20
        $region19: #{tpu_custom_call.1} parent=11 // pred_region
          _
        $region20: #{tpu_custom_call.1} parent=11 // pred_fallthru
          _
      $region12: #{tpu_custom_call.1} parent=5 // pred_fallthru
        _
      %p155 = scmp.lt.s32.totalorder %s15, 2
      // Predicated region
      $region21: #{tpu_custom_call.1} parent=5 // pred_check
        %p156 = pneg %p155
      $region22: #{tpu_custom_call.1} parent=5 // pred_check_branch
        %158 = sbr.rel (%p156) target = $region24
      $region23: #{tpu_custom_call.1} parent=5 // pred_region
        // Predicated region
        $region25: #{tpu_custom_call.1} parent=23 // pred_check
          %p159 = pneg %p49
        $region26: #{tpu_custom_call.1} parent=23 // pred_check_branch
          %161 = sbr.rel (%p159) target = $region28
        $region27: #{tpu_custom_call.1} parent=23 // pred_region
          %s162 = sand.u32 %s39, 1
          %s163 = scalar_lea.sflag [#allocation3], %s162
          %s164 = sand.u32 %s39, 1
          %s165 = smul.addr %s164, 8
          %s166 = scalar_lea.vmem [#allocation2], %s165
          %168 = vsyncadd %s163, 0
          %s169 = smul.addr %s23, 2
          %s170 = smul.addr %s22, 2
          %s171 = sadd.s32 %s169, %s170
          %s172 = smul.addr %s171, 4
          %s173 = scalar_lea.hbm %s0, %s172
          %s175 = sshll.u32 %s173, 4
          %s176 = int_to_ptr.hbm [resolvable:$true] %s175
          %s177 = sshll.u32 %s166, 4
          %s178 = int_to_ptr.vmem [resolvable:$true] %s177
          %180 = dma.hbm_to_vmem [thread:$0]  %s176, 128, %s178, %s163
        $region28: #{tpu_custom_call.1} parent=23 // pred_fallthru
          _
      $region24: #{tpu_custom_call.1} parent=5 // pred_fallthru
        _
      %p181 = scmp.le.s32.totalorder 1, %s15
      %p182 = scmp.lt.s32.totalorder %s15, 3
      %p183 = pnand %p181, %p182
      %p184 = pneg %p183
      // Predicated region
      $region29: #{tpu_custom_call.1} parent=5 // pred_check
        _
      $region30: #{tpu_custom_call.1} parent=5 // pred_check_branch
        %186 = sbr.rel (%p183) target = $region32
      $region31: #{tpu_custom_call.1} parent=5 // pred_region
        %s187 = ssub.s32 %s15, 1
        %s188 = sand.u32 %s42, 1
        %s189 = scalar_lea.sflag [#allocation3], %s188
        %s190 = sand.u32 %s42, 1
        %s191 = smul.addr %s190, 8
        %s192 = scalar_lea.vmem [#allocation2], %s191
        // Predicated region
        $region33: #{tpu_custom_call.1} parent=31 // pred_check
          %p193 = pneg %p55
        $region34: #{tpu_custom_call.1} parent=31 // pred_check_branch
          %195 = sbr.rel (%p193) target = $region36
        $region35: #{tpu_custom_call.1} parent=31 // pred_region
          %197 = dma.done %s189, 128
        $region36: #{tpu_custom_call.1} parent=31 // pred_fallthru
          _
        %s198 = sand.u32 %s42, 1
        %s199 = scalar_lea.sflag [#allocation3], %s198
        %s200 = sand.u32 %s42, 1
        %s201 = smul.addr %s200, 8
        %s202 = scalar_lea.vmem [#allocation2], %s201
        %p203 = pneg %p55
        %p204 = pneg %p52
        %p205 = scmp.lt.s32.totalorder %s25, 0
        %s206 = scalar_select %p205, %s25, 0
        %s207 = smul.addr %s206, 4
        %s208 = scalar_lea.vmem %s1, %s207
        %p209 = pneg %p81
        %p210 = pneg %p78
        %p211 = pneg %p102
        %p212 = pneg %p99
        %p213 = pneg %p130
        %p214 = pneg %p127
        %s215 = sand.u32 %s117, 1
        %s216 = scalar_lea.sflag [#allocation4], %s215
        %s217 = sand.u32 %s117, 1
        %s218 = smul.addr %s217, 8
        %s219 = scalar_lea.vmem [#allocation5], %s218
        %p220 = scmp.lt.s32.totalorder %s25, 0
        %s221 = scalar_select %p220, %s25, 0
        %s222 = smul.addr %s221, 4
        %s223 = scalar_lea.vmem %s1, %s222
        %v224 = vld [vmem:[%s192] sm:$0xff]
        %v225 = vld [vmem:[%s223] sm:$0xf]
        %v226 = vld [vmem:[%s2] sm:$0x3]
        %vm227 = vcmp.eq.s32.totalorder %v225, 4294967295
        %229 = vst [vmem:[#allocation1] ss:$2 sm:$0xff] %v224
        %v230 = vld.sshfl [vmem:[#allocation1] sm:$0xff pattern:$0x75316420]
        %v231 = vld.sshfl [vmem:[#allocation1 + $0x8] sm:$0xff pattern:$0x75316420]
        %234 = vrot.lane.b32.xlu0 %v230, 127
        %v235 = vpop.permute.xlu0 %234
        %236 = vrot.lane.b32.xlu0 %v231, 127
        %v237 = vpop.permute.xlu0 %236
        %v238 = vlaneseq
        %v239 = vand.u32 %v238, 127
        %vm240 = vcmp.lt.s32.totalorder %v239, 127
        %v241 = vsel %vm240, %v235, %v237
        %v242 = vsel %vm240, %v237, %v235
        %vm243 = vcmp.ge.s32.totalorder %v226, 4294967295
        %vm244 = vcmp.lt.s32.totalorder %v226, 15
        %vm245 = vmand %vm243, %vm244
        %v246 = vsel %vm227, 1, 0
        %247 = vset.pattern.permute.xlu0 0
        %248 = vperm.xlu0 %247, %v246
        %v249 = vpop.permute.xlu0 %248
        %vm250 = vcmp.eq.s32.totalorder %v249, 1
        %v251 = vsel %vm245, 1, 0
        %v252 = vperm.slane %v251, 0
        %v253 = vperm.slane %v251, 1
        %vm254 = vcmp.eq.s32.totalorder %v252, 1
        %vm255 = vcmp.eq.s32.totalorder %v253, 1
        %vm256 = vmand %vm250, %vm254
        %vm257 = vmand %vm250, %vm255
        %v258 = vsel %vm256, %v241, 0.0
        %v259 = vsel %vm257, %v242, 0.0
        %vm260 = vcmp.eq.s32.totalorder %v225, 0
        %v261 = vsel %vm260, 1, 0
        %262 = vset.pattern.permute.xlu0 0
        %263 = vperm.xlu0 %262, %v261
        %v264 = vpop.permute.xlu0 %263
        %vm265 = vcmp.eq.s32.totalorder %v264, 1
        %266 = vst [vmem:[#allocation1] ss:$2 sm:$0xff] %v224
        %v267 = vld.sshfl [vmem:[#allocation1] sm:$0xff pattern:$0x75316420]
        %v268 = vld.sshfl [vmem:[#allocation1 + $0x8] sm:$0xff pattern:$0x75316420]
        %v271 = vsel %vm265, %v267, %v258
        %v272 = vsel %vm265, %v268, %v259
        %vm273 = vcmp.eq.s32.totalorder %v225, 1
        %274 = vst [vmem:[#allocation1] ss:$2 sm:$0xff] %v224
        %v275 = vld.sshfl [vmem:[#allocation1] sm:$0xff pattern:$0x75316420]
        %v276 = vld.sshfl [vmem:[#allocation1 + $0x8] sm:$0xff pattern:$0x75316420]
        %279 = vrot.lane.b32.xlu0 %v275, 1
        %v280 = vpop.permute.xlu0 %279
        %281 = vrot.lane.b32.xlu0 %v276, 1
        %v282 = vpop.permute.xlu0 %281
        %vm283 = vcmp.lt.s32.totalorder %v239, 1
        %v284 = vsel %vm283, %v280, %v282
        %v285 = vsel %vm283, %v282, %v280
        %vm286 = vcmp.ge.s32.totalorder %v226, 1
        %vm287 = vcmp.lt.s32.totalorder %v226, 17
        %vm288 = vmand %vm286, %vm287
        %v289 = vsel %vm273, 1, 0
        %290 = vset.pattern.permute.xlu0 0
        %291 = vperm.xlu0 %290, %v289
        %v292 = vpop.permute.xlu0 %291
        %vm293 = vcmp.eq.s32.totalorder %v292, 1
        %v294 = vsel %vm288, 1, 0
        %v295 = vperm.slane %v294, 0
        %v296 = vperm.slane %v294, 1
        %vm297 = vcmp.eq.s32.totalorder %v295, 1
        %vm298 = vcmp.eq.s32.totalorder %v296, 1
        %vm299 = vmand %vm293, %vm297
        %vm300 = vmand %vm293, %vm298
        %v301 = vsel %vm299, %v285, %v271
        %v302 = vsel %vm300, %v284, %v272
        %v305 = vrot.slane %v302, 4
        %vm306 = vcmask 1043456
        %v307 = vsel %vm306, %v301, %v305
        %309 = vst [vmem:[%s219] sm:$0xff] %v307
        %s310 = sand.u32 %s117, 1
        %s311 = scalar_lea.sflag [#allocation4], %s310
        %s312 = sand.u32 %s117, 1
        %s313 = smul.addr %s312, 8
        %s314 = scalar_lea.vmem [#allocation5], %s313
        // Predicated region
        $region37: #{tpu_custom_call.1} parent=31 // pred_check
          %p315 = pneg %p127
        $region38: #{tpu_custom_call.1} parent=31 // pred_check_branch
          %317 = sbr.rel (%p315) target = $region40
        $region39: #{tpu_custom_call.1} parent=31 // pred_region
          %319 = vsyncadd %s311, 0
          %s320 = smul.addr %s25, 2
          %s321 = smul.addr %s24, 2
          %s322 = sadd.s32 %s320, %s321
          %s323 = smul.addr %s322, 4
          %s324 = scalar_lea.hbm %s3, %s323
          %s326 = sshll.u32 %s314, 4
          %s327 = int_to_ptr.vmem [resolvable:$true] %s326
          %s328 = sshll.u32 %s324, 4
          %s329 = int_to_ptr.hbm [resolvable:$true] %s328
          %331 = dma.vmem_to_hbm [thread:$0]  %s327, 128, %s329, %s311
        $region40: #{tpu_custom_call.1} parent=31 // pred_fallthru
          _
      $region32: #{tpu_custom_call.1} parent=5 // pred_fallthru
        _
      %p332 = scmp.le.s32.totalorder 2, %s15
      // Predicated region
      $region41: #{tpu_custom_call.1} parent=5 // pred_check
        %p333 = pneg %p332
      $region42: #{tpu_custom_call.1} parent=5 // pred_check_branch
        %335 = sbr.rel (%p333) target = $region44
      $region43: #{tpu_custom_call.1} parent=5 // pred_region
        %s336 = ssub.s32 %s15, 2
        // Predicated region
        $region45: #{tpu_custom_call.1} parent=43 // pred_check
          %p337 = pneg %p133
        $region46: #{tpu_custom_call.1} parent=43 // pred_check_branch
          %339 = sbr.rel (%p337) target = $region48
        $region47: #{tpu_custom_call.1} parent=43 // pred_region
          %s340 = sand.u32 %s118, 1
          %s341 = scalar_lea.sflag [#allocation4], %s340
          %s342 = sand.u32 %s118, 1
          %s343 = smul.addr %s342, 8
          %s344 = scalar_lea.vmem [#allocation5], %s343
          %346 = dma.done %s341, 128
        $region48: #{tpu_custom_call.1} parent=43 // pred_fallthru
          _
      $region44: #{tpu_custom_call.1} parent=5 // pred_fallthru
        _
    $region6: #{tpu_custom_call.1} parent=1 // loop_footer
      %s19 = sadd.s32 1, %s15
    $region7: #{tpu_custom_call.1} parent=1 // loop_footer_branch
      %14 = sbr.rel target = $region3
    $region8: #{tpu_custom_call.1} parent=1 // loop_exit
      _
    %347 = vsyncpa [#allocation3], 1
    %s348 = scalar_lea.sflag [#allocation3], 1
    %349 = vsyncpa %s348, 1
    %350 = vsyncpa [#allocation4], 1
    %s351 = scalar_lea.sflag [#allocation4], 1
    %352 = vsyncpa %s351, 1

</llo_original>
